<compile_context>
chip_gen: v6e
topology: v6e:2x2x1
jax: 0.10.0
libtpu: 0.0.40
codegen_flags: <defaults>
</compile_context>

<pallas_src>
import functools
import math

import jax
import jax.numpy as jnp
from jax.experimental import pallas as pl
from jax.experimental.pallas import tpu as pltpu


def _batchnorm_kernel(x_ref, gamma_ref, beta_ref, o_ref, *, eps: float, inv_n: float):
    # x_ref: (N, TILE_F) slab in VMEM.  gamma_ref/beta_ref: (num_blocks, TILE_F)
    # resident parameter tables (constant index_map -> DMA'd once).
    j = pl.program_id(0)

    x_in = x_ref[...]
    x = x_in.astype(jnp.float32)

    # Single sweep: sum(x) and sum(x*x); var = E[x^2] - mean^2 in f32,
    # clamped at 0 to guard against cancellation for large-mean data.
    s1 = jnp.sum(x, axis=0, keepdims=True)          # (1, TF)
    s2 = jnp.sum(x * x, axis=0, keepdims=True)      # (1, TF)
    mean = s1 * inv_n
    var = jnp.maximum(s2 * inv_n - mean * mean, 0.0)

    inv_std = jax.lax.rsqrt(var + eps)               # EUP rsqrt, (1, TF)
    gamma = gamma_ref[pl.ds(j, 1), :].astype(jnp.float32)
    beta = beta_ref[pl.ds(j, 1), :].astype(jnp.float32)
    scale = gamma * inv_std                          # (1, TF)
    shift = beta - mean * scale                      # (1, TF)

    if jnp.dtype(x_ref.dtype) == jnp.dtype(jnp.bfloat16):
        # bf16 VALU normalize on v6e/v7x; stats above remain f32.
        y = x_in * scale.astype(jnp.bfloat16) + shift.astype(jnp.bfloat16)
    else:
        y = x * scale + shift
    o_ref[...] = y.astype(o_ref.dtype)


def _vmem_budget():
    """(physical VMEM bytes, usable budget) for the current TPU generation."""
    try:
        info = pltpu.get_tpu_info()
        capacity = int(getattr(info, "vmem_capacity_bytes", 64 << 20))
    except Exception:  # no device / query unavailable -> conservative default
        capacity = 64 << 20
    capacity = max(capacity, 32 << 20)
    usable = (capacity * 7) // 8      # ~56 MiB on v7x, ~112 MiB on v5e/v6e
    return capacity, usable


def _choose_tile_f(n, f, itemsize, vmem_usable):
    """Largest lane width (multiple of 128, or the full feature dim) whose
    double-buffered pipeline footprint fits VMEM, targeting ~8 MiB input slabs."""
    if f <= 128:
        return f  # full-dim block (block_shape == array dim is always legal)
    # Bytes per feature column across 2 in + 2 out pipeline buffers + f32 temps.
    per_col = n * (4 * itemsize + 2 * 4)
    by_vmem = max((vmem_usable - (8 << 20)) // max(per_col, 1), 1)
    by_slab = max((8 << 20) // max(n * itemsize, 1), 128)
    tile = min(by_vmem, by_slab)
    if tile >= f:
        return f  # whole feature dim in one block (no masking, grid of 1)
    # TODO(synk): if by_vmem < 128 (huge N) this still returns 128; a two-pass
    # batch-chunked stats grid would bound VMEM independent of N.
    return max((tile // 128) * 128, 128)


def batch_norm_forward(x, gamma, beta, num_features, *, eps=1e-5):
    """Pallas equivalent of BatchNorm.forward (training-mode batch stats).

    x: (N, *num_features) array.  gamma, beta: (F,) with F = prod(num_features).
    Returns an array of shape (N, *num_features).
    """
    n = x.shape[0]
    f = int(math.prod(num_features))

    x2d = x.reshape(n, f)                       # flatten(start_dim=1); no HBM padding
    itemsize = jnp.dtype(x.dtype).itemsize

    _, vmem_usable = _vmem_budget()
    tile_f = _choose_tile_f(n, f, itemsize, vmem_usable)
    num_blocks = -(-f // tile_f)
    f_param = num_blocks * tile_f

    # Only the tiny parameter tables are padded (so per-block slicing inside the
    # kernel is always in range); x itself is never padded or sliced in HBM.
    gamma1d = gamma.reshape(f)
    beta1d = beta.reshape(f)
    if f_param != f:
        gamma1d = jnp.pad(gamma1d, (0, f_param - f))
        beta1d = jnp.pad(beta1d, (0, f_param - f))
    gamma2d = gamma1d.reshape(num_blocks, tile_f)
    beta2d = beta1d.reshape(num_blocks, tile_f)

    # VMEM request sized from the actual footprint; never clamped below it.
    footprint = (
        4 * n * tile_f * itemsize      # 2 input + 2 output pipeline buffers
        + 2 * n * tile_f * 4           # in-kernel f32 temporaries
        + 2 * f_param * 4              # resident gamma/beta tables
        + (4 << 20)                    # headroom for Mosaic internal scratch
    )
    vmem_limit = int(min(max(footprint, 32 << 20), vmem_usable))
    vmem_limit = max(vmem_limit, int(footprint))

    out2d = pl.pallas_call(
        functools.partial(_batchnorm_kernel, eps=float(eps), inv_n=1.0 / n),
        out_shape=jax.ShapeDtypeStruct((n, f), x.dtype),
        grid=(num_blocks,),
        in_specs=[
            pl.BlockSpec((n, tile_f), lambda j: (0, j)),
            pl.BlockSpec((num_blocks, tile_f), lambda j: (0, 0)),  # resident
            pl.BlockSpec((num_blocks, tile_f), lambda j: (0, 0)),  # resident
        ],
        out_specs=pl.BlockSpec((n, tile_f), lambda j: (0, j)),
        compiler_params=pltpu.CompilerParams(
            dimension_semantics=("parallel",),
            vmem_limit_bytes=vmem_limit,
        ),
    )(x2d, gamma2d, beta2d)

    return out2d.reshape((-1,) + tuple(num_features))  # .view((-1,) + num_features)


def _reference(x, gamma, beta, num_features, eps=1e-5):
    n = x.shape[0]
    f = int(math.prod(num_features))
    x2d = x.reshape(n, f).astype(jnp.float32)
    mean = jnp.mean(x2d, axis=0, keepdims=True)
    var = jnp.mean((x2d - mean) ** 2, axis=0, keepdims=True)
    y = (x2d - mean) / jnp.sqrt(var + eps) * gamma.reshape(1, f) + beta.reshape(1, f)
    return y.reshape((-1,) + tuple(num_features)).astype(x.dtype)


if __name__ == "__main__":
    key = jax.random.PRNGKey(0)
    k_x, k_g, k_b = jax.random.split(key, 3)

    # BatchNorm(num_features=(4, 16)) -> flat feature dim F = 64
    num_features = (4, 16)
    batch = 8
    F = 4 * 16

    x = jax.random.normal(k_x, (batch,) + num_features, dtype=jnp.float32)

    # PyTorch default init is weight=1, bias=0; perturb deterministically so the
    # affine path is actually exercised.
    gamma = jnp.ones((F,), jnp.float32) + 0.1 * jax.random.normal(k_g, (F,), jnp.float32)
    beta = 0.1 * jax.random.normal(k_b, (F,), jnp.float32)

    out = batch_norm_forward(x, gamma, beta, num_features, eps=1e-5)
    out = jax.block_until_ready(out)

    ref = _reference(x, gamma, beta, num_features, eps=1e-5)
    assert out.shape == (batch,) + num_features, out.shape
    assert jnp.allclose(out, ref, atol=1e-5, rtol=1e-5), float(jnp.max(jnp.abs(out - ref)))

    print("KERNEL_OK")
</pallas_src>

<mosaic_0001>
module attributes {stable_mosaic.version = 11 : i64} {
  func.func @_batchnorm_kernel(%arg0: i32, %arg1: memref<8x64xf32, #tpu.memory_space<vmem>>, %arg2: memref<1x64xf32, #tpu.memory_space<vmem>>, %arg3: memref<1x64xf32, #tpu.memory_space<vmem>>, %arg4: memref<8x64xf32, #tpu.memory_space<vmem>>) attributes {dimension_semantics = [#tpu.dimension_semantics<parallel>], iteration_bounds = array<i64: 1>, scalar_prefetch = 0 : i64, scratch_operands = 0 : i64, tpu.core_type = #tpu.core_type<tc>, window_params = [{transform_indices = @transform_0, window_bounds = array<i64: 8, 64>}, {pipeline_mode = #tpu.pipeline_mode<synchronous>, transform_indices = @transform_1, window_bounds = array<i64: 1, 64>}, {pipeline_mode = #tpu.pipeline_mode<synchronous>, transform_indices = @transform_2, window_bounds = array<i64: 1, 64>}, {transform_indices = @transform_3, window_bounds = array<i64: 8, 64>}]} {
    %c0 = arith.constant 0 : index
    %c0_0 = arith.constant 0 : index
    %0 = vector.load %arg1[%c0, %c0_0] : memref<8x64xf32, #tpu.memory_space<vmem>>, vector<8x64xf32>
    %cst = arith.constant dense<0.000000e+00> : vector<64xf32>
    %1 = vector.multi_reduction <add>, %0, %cst [0] : vector<8x64xf32> to vector<64xf32>
    %2 = vector.shape_cast %1 : vector<64xf32> to vector<1x64xf32>
    %3 = arith.mulf %0, %0 : vector<8x64xf32>
    %cst_1 = arith.constant dense<0.000000e+00> : vector<64xf32>
    %4 = vector.multi_reduction <add>, %3, %cst_1 [0] : vector<8x64xf32> to vector<64xf32>
    %5 = vector.shape_cast %4 : vector<64xf32> to vector<1x64xf32>
    %cst_2 = arith.constant 1.250000e-01 : f32
    %6 = vector.broadcast %cst_2 : f32 to vector<1x64xf32>
    %7 = arith.mulf %2, %6 : vector<1x64xf32>
    %cst_3 = arith.constant 1.250000e-01 : f32
    %8 = vector.broadcast %cst_3 : f32 to vector<1x64xf32>
    %9 = arith.mulf %5, %8 : vector<1x64xf32>
    %10 = arith.mulf %7, %7 : vector<1x64xf32>
    %11 = arith.subf %9, %10 : vector<1x64xf32>
    %cst_4 = arith.constant 0.000000e+00 : f32
    %12 = vector.broadcast %cst_4 : f32 to vector<1x64xf32>
    %13 = arith.maximumf %11, %12 : vector<1x64xf32>
    %cst_5 = arith.constant 9.99999974E-6 : f32
    %14 = vector.broadcast %cst_5 : f32 to vector<1x64xf32>
    %15 = arith.addf %13, %14 : vector<1x64xf32>
    %16 = math.rsqrt %15 : vector<1x64xf32>
    %17 = arith.index_cast %arg0 : i32 to index
    %c0_6 = arith.constant 0 : index
    %18 = vector.load %arg2[%17, %c0_6] : memref<1x64xf32, #tpu.memory_space<vmem>>, vector<1x64xf32>
    %19 = arith.index_cast %arg0 : i32 to index
    %c0_7 = arith.constant 0 : index
    %20 = vector.load %arg3[%19, %c0_7] : memref<1x64xf32, #tpu.memory_space<vmem>>, vector<1x64xf32>
    %21 = arith.mulf %18, %16 : vector<1x64xf32>
    %22 = arith.mulf %7, %21 : vector<1x64xf32>
    %23 = arith.subf %20, %22 : vector<1x64xf32>
    %24 = vector.broadcast %21 : vector<1x64xf32> to vector<8x64xf32>
    %25 = arith.mulf %0, %24 : vector<8x64xf32>
    %26 = vector.broadcast %23 : vector<1x64xf32> to vector<8x64xf32>
    %27 = arith.addf %25, %26 : vector<8x64xf32>
    %c0_8 = arith.constant 0 : index
    %c0_9 = arith.constant 0 : index
    %28 = vector.load %arg4[%c0_8, %c0_9] : memref<8x64xf32, #tpu.memory_space<vmem>>, vector<8x64xf32>
    tpu.vector_store %arg4[%c0_8, %c0_9], %27 {strides = array<i32>} : memref<8x64xf32, #tpu.memory_space<vmem>>, vector<8x64xf32>,
    return
  }
  func.func @transform_0(%arg0: i32) -> (i32, i32) {
    %c0_i32 = arith.constant 0 : i32
    %c0_i32_0 = arith.constant 0 : i32
    return %c0_i32, %arg0 : i32, i32
  }
  func.func @transform_1(%arg0: i32) -> (i32, i32) {
    %c0_i32 = arith.constant 0 : i32
    %c0_i32_0 = arith.constant 0 : i32
    %c0_i32_1 = arith.constant 0 : i32
    return %c0_i32, %c0_i32_0 : i32, i32
  }
  func.func @transform_2(%arg0: i32) -> (i32, i32) {
    %c0_i32 = arith.constant 0 : i32
    %c0_i32_0 = arith.constant 0 : i32
    %c0_i32_1 = arith.constant 0 : i32
    return %c0_i32, %c0_i32_0 : i32, i32
  }
  func.func @transform_3(%arg0: i32) -> (i32, i32) {
    %c0_i32 = arith.constant 0 : i32
    %c0_i32_0 = arith.constant 0 : i32
    return %c0_i32, %arg0 : i32, i32
  }
}

</mosaic_0001>

<llo_original>
// kernel: tpu_custom_call.1
$region0: #{tpu_custom_call.1}
  #allocation0 [shape = 'u32[]', space=smem, size = 0x4, offset = 0x4, fixed_abs, tag = 'smem constant byte address 0x4 - core index']
  #allocation1 [shape = 'u32[144,128]{1,0:T(1,128)}', space=vmem, size = 0x12000, scoped, tag = 'internal scratch']
  %s0 = inlined_call_operand.hbm [shape: f32[8,64], index: 0, kind: input, shape index: {}]
  %s1 = inlined_call_operand.vmem [shape: f32[1,64], index: 1, kind: input, shape index: {}]
  %s2 = inlined_call_operand.vmem [shape: f32[1,64], index: 2, kind: input, shape index: {}]
  %s3 = inlined_call_operand.hbm [shape: f32[8,64], index: 3, kind: output, shape index: {}]
  %s4 = sld [smem:[#allocation0]]
  $region26: #{tpu_custom_call.1} parent=0
    _
  %s6 = ssub.s32 1, %s4
  %s7 = scalar_select 0, %s6, %s4
  $region1: #{tpu_custom_call.1} parent=0
    #allocation2 [shape = 'u8[4096]{0}', space=vmem, size = 0x1000, scoped, tag = 'input window, operand 0, single buffered']
    #allocation3 [shape = 's32[1]{0}', space=sflag, size = 0x4, scoped, tag = 'scoped memory for tpu_custom_call.1']
    #allocation4 [shape = 's32[1]{0}', space=sflag, size = 0x4, scoped, tag = 'scoped memory for tpu_custom_call.1']
    #allocation5 [shape = 'u8[4096]{0}', space=vmem, size = 0x1000, scoped, tag = 'output window, operand 0, single buffered']
    %8 = vsyncpa [#allocation3], 0
    %9 = vsyncpa [#allocation4], 0
    // Predicated region
    $region2: #{tpu_custom_call.1} parent=1 // pred_check
      _
    $region3: #{tpu_custom_call.1} parent=1 // pred_check_branch
      %11 = sbr.rel (0) target = $region5
    $region4: #{tpu_custom_call.1} parent=1 // pred_region
      %s13 = ssub.s32 128, 128
      %14 = vsyncadd [#allocation3], %s13
      %s16 = sshll.u32 [#allocation2], 4
      %s17 = int_to_ptr.vmem [resolvable:$true] %s16
      %19 = dma.hbm_to_vmem [thread:$0]  %s0, 128, %s17, [#allocation3]
    $region5: #{tpu_custom_call.1} parent=1 // pred_fallthru
      _
    // Predicated region
    $region6: #{tpu_custom_call.1} parent=1 // pred_check
      _
    $region7: #{tpu_custom_call.1} parent=1 // pred_check_branch
      %21 = sbr.rel (0) target = $region9
    $region8: #{tpu_custom_call.1} parent=1 // pred_region
      _
    $region9: #{tpu_custom_call.1} parent=1 // pred_fallthru
      _
    // Predicated region
    $region10: #{tpu_custom_call.1} parent=1 // pred_check
      _
    $region11: #{tpu_custom_call.1} parent=1 // pred_check_branch
      %23 = sbr.rel (0) target = $region13
    $region12: #{tpu_custom_call.1} parent=1 // pred_region
      _
    $region13: #{tpu_custom_call.1} parent=1 // pred_fallthru
      _
    // Predicated region
    $region14: #{tpu_custom_call.1} parent=1 // pred_check
      _
    $region15: #{tpu_custom_call.1} parent=1 // pred_check_branch
      %25 = sbr.rel (0) target = $region17
    $region16: #{tpu_custom_call.1} parent=1 // pred_region
      %26 = dma.done [#allocation3], 128
    $region17: #{tpu_custom_call.1} parent=1 // pred_fallthru
      _
    %v27 = vld [vmem:[#allocation2] sm:$0xff]
    %vm28 = vcmask 523264
    %v29 = vsel %vm28, %v27, 0.0
    %v30 = vrot.slane %v29, 4
    %v31 = vadd.f32 %v29, %v30
    %v32 = vrot.slane %v31, 2
    %v33 = vadd.f32 %v31, %v32
    %v34 = vrot.slane %v33, 1
    %v35 = vadd.f32 %v33, %v34
    %v36 = vmul.f32 %v27, %v27
    %v37 = vsel %vm28, %v36, 0.0
    %v38 = vrot.slane %v37, 4
    %v39 = vadd.f32 %v37, %v38
    %v40 = vrot.slane %v39, 2
    %v41 = vadd.f32 %v39, %v40
    %v42 = vrot.slane %v41, 1
    %v43 = vadd.f32 %v41, %v42
    %v44 = vmul.f32 %v35, 0.125
    %v45 = vmul.f32 %v43, 0.125
    %v46 = vmul.f32 %v44, %v44
    %v47 = vsub.f32 %v45, %v46
    %v48 = vmax.f32 %v47, 0.0
    %v49 = vadd.f32 %v48, 1e-05
    %v50 = vrsqrt.pop %v49
    %v51 = vld [vmem:[%s1] sm:$0x1]
    %v52 = vld [vmem:[%s2] sm:$0x1]
    %v53 = vmul.f32 %v51, %v50
    %v54 = vmul.f32 %v44, %v53
    %v55 = vsub.f32 %v52, %v54
    %v57 = vlaneseq
    %v58 = vshrl.u32 %v57, 7
    %v59 = vsub.s32 0, %v58
    %v60 = vrot.slane %v53, %v59
    %v62 = vmul.f32 %v27, %v60
    %v64 = vlaneseq
    %v65 = vshrl.u32 %v64, 7
    %v66 = vsub.s32 0, %v65
    %v67 = vrot.slane %v55, %v66
    %v69 = vadd.f32 %v62, %v67
    %70 = vst.msk [vmem:[#allocation5] sm:$0xff] %vm28, %v69
    // Predicated region
    $region18: #{tpu_custom_call.1} parent=1 // pred_check
      _
    $region19: #{tpu_custom_call.1} parent=1 // pred_check_branch
      %72 = sbr.rel (0) target = $region21
    $region20: #{tpu_custom_call.1} parent=1 // pred_region
      %s74 = ssub.s32 128, 128
      %75 = vsyncadd [#allocation4], %s74
      %s77 = sshll.u32 [#allocation5], 4
      %s78 = int_to_ptr.vmem [resolvable:$true] %s77
      %80 = dma.vmem_to_hbm [thread:$0]  %s78, 128, %s3, [#allocation4]
    $region21: #{tpu_custom_call.1} parent=1 // pred_fallthru
      _
    // Predicated region
    $region22: #{tpu_custom_call.1} parent=1 // pred_check
      _
    $region23: #{tpu_custom_call.1} parent=1 // pred_check_branch
      %82 = sbr.rel (0) target = $region25
    $region24: #{tpu_custom_call.1} parent=1 // pred_region
      %83 = dma.done [#allocation4], 128
    $region25: #{tpu_custom_call.1} parent=1 // pred_fallthru
      _
    %84 = vsyncpa [#allocation3], 1
    %85 = vsyncpa [#allocation4], 1

</llo_original>
